<compile_context>
chip_gen: v6e
topology: v6e:2x2x1
jax: 0.10.0
libtpu: 0.0.40
codegen_flags: <defaults>
</compile_context>

<pallas_src>
import jax
import jax.numpy as jnp
import numpy as np
from jax.experimental import pallas as pl
from jax.experimental.pallas import tpu as pltpu

# Problem sizes (small, consistent with the module).
B, CIN, H, W = 2, 4, 16, 16          # input  (B, Cin, H, W)
COUT = 8                             # out_channels
KS, STRIDE, PAD = 3, 2, 1            # Conv2d defaults of ConvNorm
HO = (H + 2 * PAD - KS) // STRIDE + 1
WO = (W + 2 * PAD - KS) // STRIDE + 1
M = B * HO * WO                      # 128 output positions (lane axis)
K = KS * KS * CIN                    # 36  contraction size
BN_EPS = 1e-5


def conv_norm_kernel(p_ref, w_ref, gamma_ref, beta_ref, o_ref):
    """Conv-as-matmul + training-mode BatchNorm2d, fully fused.

    p_ref:     (K, M)    bf16 im2col patches, lane-dense (M on lanes)
    w_ref:     (Cout, K) bf16 conv weight, tap-major (kh, kw, cin)
    gamma_ref: (Cout, 1) f32 BN weight
    beta_ref:  (Cout, 1) f32 BN bias
    o_ref:     (Cout, M) f32 normalized output, lane-dense
    """
    # Convolution: one MXU matmul, bf16 operands, f32 accumulation.
    y = jnp.dot(w_ref[...], p_ref[...],
                preferred_element_type=jnp.float32)           # (Cout, M) f32

    # BatchNorm2d training statistics per channel (rows).  Centered two-pass
    # form (y is already resident in vregs, so the second pass is free and
    # avoids E[y^2] - mean^2 cancellation).
    inv_m = jnp.float32(1.0 / M)
    mean = jnp.sum(y, axis=1, keepdims=True) * inv_m          # (Cout, 1)
    yc = y - mean
    var = jnp.sum(yc * yc, axis=1, keepdims=True) * inv_m     # biased variance
    inv_std = jax.lax.rsqrt(var + BN_EPS)                     # EUP

    # Per-channel affine folded into a single FMA; refs read exactly once.
    scale = gamma_ref[...] * inv_std                          # (Cout, 1)
    o_ref[...] = (yc * scale + beta_ref[...]).astype(o_ref.dtype)


def conv_norm(x, w, gamma, beta):
    """ConvNorm forward.  x: (B, Cin, H, W) NCHW, w: (Cout, Cin, KH, KW)."""
    # ---- wrapper-side layout plumbing only (no compute hoisted) ----
    # One tiny transpose of the input to channel-major, then pad spatially.
    x_cbhw = jnp.transpose(x, (1, 0, 2, 3))                     # (Cin, B, H, W)
    x_pad = jnp.pad(x_cbhw, ((0, 0), (0, 0), (PAD, PAD), (PAD, PAD)))

    # im2col with stride 2: 9 strided taps, stacked along a NEW leading axis,
    # reshaped directly to the lane-dense (K, M) layout — no (M, K) transpose.
    taps = []
    for kh in range(KS):
        for kw in range(KS):
            taps.append(x_pad[:, :, kh:kh + STRIDE * HO:STRIDE,
                              kw:kw + STRIDE * WO:STRIDE])       # (Cin, B, Ho, Wo)
    patches = jnp.stack(taps, axis=0)                            # (9, Cin, B, Ho, Wo)
    # K row order = (kh, kw, cin); M column order = (B, Ho, Wo).
    patches_t = patches.reshape(K, M).astype(jnp.bfloat16)       # (K, M) bf16

    # Conv weight (Cout, Cin, KH, KW) -> (Cout, K), matching tap-major order.
    w_t = jnp.transpose(w, (0, 2, 3, 1)).reshape(COUT, K).astype(jnp.bfloat16)

    vmem = pl.BlockSpec(memory_space=pltpu.MemorySpace.VMEM)
    out_t = pl.pallas_call(
        conv_norm_kernel,
        out_shape=jax.ShapeDtypeStruct((COUT, M), jnp.float32),
        in_specs=[vmem, vmem, vmem, vmem],
        out_specs=vmem,
    )(patches_t, w_t,
      gamma.reshape(COUT, 1).astype(jnp.float32),
      beta.reshape(COUT, 1).astype(jnp.float32))

    # (Cout, B*Ho*Wo) -> (B, Cout, Ho, Wo)
    return jnp.transpose(out_t.reshape(COUT, B, HO, WO), (1, 0, 2, 3))


def reference(x, w, gamma, beta):
    """Pure-JAX mirror of the PyTorch forward (training-mode BatchNorm2d)."""
    y = jax.lax.conv_general_dilated(
        x, w, window_strides=(STRIDE, STRIDE),
        padding=((PAD, PAD), (PAD, PAD)),
        dimension_numbers=('NCHW', 'OIHW', 'NCHW'))
    m = y.mean(axis=(0, 2, 3), keepdims=True)
    v = ((y - m) ** 2).mean(axis=(0, 2, 3), keepdims=True)      # biased variance
    g = gamma.reshape(1, -1, 1, 1)
    b = beta.reshape(1, -1, 1, 1)
    return (y - m) / jnp.sqrt(v + BN_EPS) * g + b


if __name__ == "__main__":
    key = jax.random.PRNGKey(0)
    kx, kw, kg, kb = jax.random.split(key, 4)

    x = jax.random.normal(kx, (B, CIN, H, W), jnp.float32)
    w = jax.random.normal(kw, (COUT, CIN, KS, KS), jnp.float32) / np.sqrt(CIN * KS * KS)
    # BatchNorm affine params (default init is gamma=1, beta=0; perturb slightly
    # to exercise the affine path — forward semantics are identical).
    gamma = 1.0 + 0.1 * jax.random.normal(kg, (COUT,), jnp.float32)
    beta = 0.1 * jax.random.normal(kb, (COUT,), jnp.float32)

    y = conv_norm(x, w, gamma, beta)
    y = jax.block_until_ready(y)

    # NOTE: bf16 matmul operands change numerics vs the f32 PyTorch reference;
    # tolerance chosen accordingly.
    y_ref = reference(x, w, gamma, beta)
    np.testing.assert_allclose(np.asarray(y), np.asarray(y_ref), rtol=5e-2, atol=5e-2)
    print("KERNEL_OK")
</pallas_src>

<mosaic_0001>
module attributes {stable_mosaic.version = 11 : i64} {
  func.func @conv_norm_kernel(%arg0: memref<36x128xbf16, #tpu.memory_space<vmem>>, %arg1: memref<8x36xbf16, #tpu.memory_space<vmem>>, %arg2: memref<8x1xf32, #tpu.memory_space<vmem>>, %arg3: memref<8x1xf32, #tpu.memory_space<vmem>>, %arg4: memref<8x128xf32, #tpu.memory_space<vmem>>) attributes {dimension_semantics = [], scalar_prefetch = 0 : i64, scratch_operands = 0 : i64, tpu.core_type = #tpu.core_type<tc>} {
    %c0 = arith.constant 0 : index
    %c0_0 = arith.constant 0 : index
    %0 = vector.load %arg1[%c0, %c0_0] : memref<8x36xbf16, #tpu.memory_space<vmem>>, vector<8x36xbf16>
    %c0_1 = arith.constant 0 : index
    %c0_2 = arith.constant 0 : index
    %1 = vector.load %arg0[%c0_1, %c0_2] : memref<36x128xbf16, #tpu.memory_space<vmem>>, vector<36x128xbf16>
    %cst = arith.constant dense<0.000000e+00> : vector<8x128xf32>
    %2 = tpu.matmul %0, %1, %cst {dimension_numbers = #tpu.dot_dimension_numbers<[1], [0], [0], [1], [0, 0, 1, 1], [], []>} : vector<8x36xbf16>, vector<36x128xbf16>, vector<8x128xf32> -> vector<8x128xf32>
    %cst_3 = arith.constant dense<0.000000e+00> : vector<8xf32>
    %3 = vector.multi_reduction <add>, %2, %cst_3 [1] : vector<8x128xf32> to vector<8xf32>
    %4 = vector.shape_cast %3 : vector<8xf32> to vector<8x1xf32>
    %cst_4 = arith.constant 7.812500e-03 : f32
    %5 = vector.broadcast %cst_4 : f32 to vector<8x1xf32>
    %6 = arith.mulf %4, %5 : vector<8x1xf32>
    %7 = vector.broadcast %6 : vector<8x1xf32> to vector<8x128xf32>
    %8 = arith.subf %2, %7 : vector<8x128xf32>
    %9 = arith.mulf %8, %8 : vector<8x128xf32>
    %cst_5 = arith.constant dense<0.000000e+00> : vector<8xf32>
    %10 = vector.multi_reduction <add>, %9, %cst_5 [1] : vector<8x128xf32> to vector<8xf32>
    %11 = vector.shape_cast %10 : vector<8xf32> to vector<8x1xf32>
    %cst_6 = arith.constant 7.812500e-03 : f32
    %12 = vector.broadcast %cst_6 : f32 to vector<8x1xf32>
    %13 = arith.mulf %11, %12 : vector<8x1xf32>
    %cst_7 = arith.constant 9.99999974E-6 : f32
    %14 = vector.broadcast %cst_7 : f32 to vector<8x1xf32>
    %15 = arith.addf %13, %14 : vector<8x1xf32>
    %16 = math.rsqrt %15 : vector<8x1xf32>
    %c0_8 = arith.constant 0 : index
    %c0_9 = arith.constant 0 : index
    %17 = vector.load %arg2[%c0_8, %c0_9] : memref<8x1xf32, #tpu.memory_space<vmem>>, vector<8x1xf32>
    %18 = arith.mulf %17, %16 : vector<8x1xf32>
    %19 = vector.broadcast %18 : vector<8x1xf32> to vector<8x128xf32>
    %20 = arith.mulf %8, %19 : vector<8x128xf32>
    %c0_10 = arith.constant 0 : index
    %c0_11 = arith.constant 0 : index
    %21 = vector.load %arg3[%c0_10, %c0_11] : memref<8x1xf32, #tpu.memory_space<vmem>>, vector<8x1xf32>
    %22 = vector.broadcast %21 : vector<8x1xf32> to vector<8x128xf32>
    %23 = arith.addf %20, %22 : vector<8x128xf32>
    %c0_12 = arith.constant 0 : index
    %c0_13 = arith.constant 0 : index
    %24 = vector.load %arg4[%c0_12, %c0_13] : memref<8x128xf32, #tpu.memory_space<vmem>>, vector<8x128xf32>
    tpu.vector_store %arg4[%c0_12, %c0_13], %23 {strides = array<i32>} : memref<8x128xf32, #tpu.memory_space<vmem>>, vector<8x128xf32>,
    return
  }
}

</mosaic_0001>

<llo_original>
// kernel: tpu_custom_call.1
$region0: #{tpu_custom_call.1}
  #allocation0 [shape = 'u32[]', space=smem, size = 0x4, offset = 0x4, fixed_abs, tag = 'smem constant byte address 0x4 - core index']
  #allocation1 [shape = 'u32[144,128]{1,0:T(1,128)}', space=vmem, size = 0x12000, scoped, tag = 'internal scratch']
  %s0 = inlined_call_operand.hbm [shape: bf16[36,128], index: 0, kind: input, shape index: {}]
  %s1 = inlined_call_operand.vmem [shape: bf16[8,36], index: 1, kind: input, shape index: {}]
  %s2 = inlined_call_operand.vmem [shape: f32[8,1], index: 2, kind: input, shape index: {}]
  %s3 = inlined_call_operand.vmem [shape: f32[8,1], index: 3, kind: input, shape index: {}]
  %s4 = inlined_call_operand.hbm [shape: f32[8,128], index: 4, kind: output, shape index: {}]
  %s5 = sld [smem:[#allocation0]]
  $region30: #{tpu_custom_call.1} parent=0
    _
  %s7 = ssub.s32 1, %s5
  %s8 = scalar_select 0, %s7, %s5
  $region1: #{tpu_custom_call.1} parent=0
    #allocation2 [shape = 'u8[10240]{0}', space=vmem, size = 0x2800, scoped, tag = 'input window, operand 0, single buffered']
    #allocation3 [shape = 's32[1]{0}', space=sflag, size = 0x4, scoped, tag = 'scoped memory for tpu_custom_call.1']
    #allocation4 [shape = 's32[1]{0}', space=sflag, size = 0x4, scoped, tag = 'scoped memory for tpu_custom_call.1']
    #allocation5 [shape = 'u8[4096]{0}', space=vmem, size = 0x1000, scoped, tag = 'output window, operand 0, single buffered']
    %9 = vsyncpa [#allocation3], 0
    %10 = vsyncpa [#allocation4], 0
    // Predicated region
    $region2: #{tpu_custom_call.1} parent=1 // pred_check
      _
    $region3: #{tpu_custom_call.1} parent=1 // pred_check_branch
      %12 = sbr.rel (0) target = $region5
    $region4: #{tpu_custom_call.1} parent=1 // pred_region
      %s14 = ssub.s32 320, 320
      %15 = vsyncadd [#allocation3], %s14
      %s16 = sshll.u32 [#allocation2], 4
      %s17 = int_to_ptr.vmem [resolvable:$true] %s16
      %22 = dma.hbm_to_vmem [thread:$0]  %s0, 320, %s17, [#allocation3], 64, 64, 4
    $region5: #{tpu_custom_call.1} parent=1 // pred_fallthru
      _
    // Predicated region
    $region6: #{tpu_custom_call.1} parent=1 // pred_check
      _
    $region7: #{tpu_custom_call.1} parent=1 // pred_check_branch
      %24 = sbr.rel (0) target = $region9
    $region8: #{tpu_custom_call.1} parent=1 // pred_region
      _
    $region9: #{tpu_custom_call.1} parent=1 // pred_fallthru
      _
    // Predicated region
    $region10: #{tpu_custom_call.1} parent=1 // pred_check
      _
    $region11: #{tpu_custom_call.1} parent=1 // pred_check_branch
      %26 = sbr.rel (0) target = $region13
    $region12: #{tpu_custom_call.1} parent=1 // pred_region
      _
    $region13: #{tpu_custom_call.1} parent=1 // pred_fallthru
      _
    // Predicated region
    $region14: #{tpu_custom_call.1} parent=1 // pred_check
      _
    $region15: #{tpu_custom_call.1} parent=1 // pred_check_branch
      %28 = sbr.rel (0) target = $region17
    $region16: #{tpu_custom_call.1} parent=1 // pred_region
      _
    $region17: #{tpu_custom_call.1} parent=1 // pred_fallthru
      _
    // Predicated region
    $region18: #{tpu_custom_call.1} parent=1 // pred_check
      _
    $region19: #{tpu_custom_call.1} parent=1 // pred_check_branch
      %30 = sbr.rel (0) target = $region21
    $region20: #{tpu_custom_call.1} parent=1 // pred_region
      %31 = dma.done [#allocation3], 320
    $region21: #{tpu_custom_call.1} parent=1 // pred_fallthru
      _
    %v33 = vld [vmem:[%s1] sm:$0xf]
    %v34 = vld [vmem:[#allocation2] sm:$0xf]
    %v35 = vld [vmem:[#allocation2 + $0x4] sm:$0xf]
    %v36 = vld [vmem:[#allocation2 + $0x8] sm:$0xf]
    %v37 = vld [vmem:[#allocation2 + $0xc] sm:$0xf]
    %v38 = vld [vmem:[#allocation2 + $0x10] sm:$0x3]
    %v44 = vunpack.c.l.b16 %v34
    %v45 = vunpack.c.l.b16 %v35
    %v46 = vunpack.c.l.b16 %v36
    %v47 = vunpack.c.l.b16 %v37
    %v48 = vunpack.c.l.b16 %v38
    %v49 = vpack.c.b16 %v45, %v44
    %v50 = vpack.c.b16 %v47, %v46
    %v51 = vpack.c.b16 %v48, %v48
    %vm54 = vcmask 293888
    %v56 = vsel %vm54, %v33, 0
    %vm58 = vcmask 1041408
    %v60 = vsel %vm58, %v51, 0
    %62 = vmatprep.subr.bf16.mxu0 0
    %63 = vmatpush1.bf16.msra.mxu0 0
    %64 = vmatprep.subr.bf16.mxu0 0
    %65 = vmatpush1.bf16.msra.mxu0 0
    %66 = vmatprep.subr.bf16.mxu0 0
    %67 = vmatpush1.bf16.msra.mxu0 0
    %68 = vmatprep.subr.bf16.mxu0 0
    %69 = vmatpush1.bf16.msra.mxu0 0
    %70 = vmatprep.subr.bf16.mxu0 0
    %71 = vmatpush1.bf16.msra.mxu0 0
    %72 = vmatprep.subr.bf16.mxu0 0
    %73 = vmatpush1.bf16.msra.mxu0 %v60
    %74 = vmatprep.subr.bf16.mxu0 0
    %75 = vmatpush1.bf16.msra.mxu0 %v50
    %76 = vmatprep.subr.bf16.mxu0 0
    %77 = vmatpush1.bf16.msra.mxu0 %v49
    %78 = vmatprep.subr.bf16.mxu0 0
    %79 = vmatpush2.bf16.msra.mxu0 0
    %80 = vmatprep.subr.bf16.mxu0 0
    %81 = vmatpush2.bf16.msra.mxu0 0
    %82 = vmatprep.subr.bf16.mxu0 0
    %83 = vmatpush2.bf16.msra.mxu0 0
    %84 = vmatprep.subr.bf16.mxu0 0
    %85 = vmatpush2.bf16.msra.mxu0 0
    %86 = vmatprep.subr.bf16.mxu0 0
    %87 = vmatpush2.bf16.msra.mxu0 0
    %88 = vmatprep.subr.bf16.mxu0 0
    %89 = vmatpush2.bf16.msra.mxu0 0
    %90 = vmatprep.subr.bf16.mxu0 0
    %91 = vmatpush2.bf16.msra.mxu0 0
    %92 = vmatprep.subr.bf16.mxu0 0
    %93 = vmatpush2.bf16.msra.mxu0 0
    %94 = vmatprep.mubr.bf16.mxu0 0
    %95 = vmatmul.mubr.bf16.gmra.mxu0 %v56
    %v96 = vpop.f32.mrf.mxu0
    %v97 = vadd.f32 0.0, %v96
    %v98 = vpop.f32.mrf.mxu0
    %v99 = vpop.f32.mrf.mxu0
    %v100 = vpop.f32.mrf.mxu0
    %101 = vdwg.mxu0
    %102 = vadd.xlane.f32.xlu0 %v97
    %v103 = vpop.xlane.xlu0 %102
    %v104 = vmul.f32 %v103, 0.0078125
    %v105 = vsub.f32 %v97, %v104
    %v106 = vmul.f32 %v105, %v105
    %107 = vadd.xlane.f32.xlu0 %v106
    %v108 = vpop.xlane.xlu0 %107
    %v109 = vmul.f32 %v108, 0.0078125
    %v110 = vadd.f32 %v109, 1e-05
    %v111 = vrsqrt.pop %v110
    %v112 = vld [vmem:[%s2] sm:$0xff]
    %v113 = vmul.f32 %v112, %v111
    %115 = vset.pattern.permute.xlu0 0
    %116 = vperm.xlu0 %115, %v113
    %v117 = vpop.permute.xlu0 %116
    %v119 = vmul.f32 %v105, %v117
    %v120 = vld [vmem:[%s3] sm:$0xff]
    %122 = vset.pattern.permute.xlu0 0
    %123 = vperm.xlu0 %122, %v120
    %v124 = vpop.permute.xlu0 %123
    %v126 = vadd.f32 %v119, %v124
    %127 = vst [vmem:[#allocation5] sm:$0xff] %v126
    // Predicated region
    $region22: #{tpu_custom_call.1} parent=1 // pred_check
      _
    $region23: #{tpu_custom_call.1} parent=1 // pred_check_branch
      %129 = sbr.rel (0) target = $region25
    $region24: #{tpu_custom_call.1} parent=1 // pred_region
      %s131 = ssub.s32 128, 128
      %132 = vsyncadd [#allocation4], %s131
      %s134 = sshll.u32 [#allocation5], 4
      %s135 = int_to_ptr.vmem [resolvable:$true] %s134
      %137 = dma.vmem_to_hbm [thread:$0]  %s135, 128, %s4, [#allocation4]
    $region25: #{tpu_custom_call.1} parent=1 // pred_fallthru
      _
    // Predicated region
    $region26: #{tpu_custom_call.1} parent=1 // pred_check
      _
    $region27: #{tpu_custom_call.1} parent=1 // pred_check_branch
      %139 = sbr.rel (0) target = $region29
    $region28: #{tpu_custom_call.1} parent=1 // pred_region
      %140 = dma.done [#allocation4], 128
    $region29: #{tpu_custom_call.1} parent=1 // pred_fallthru
      _
    %141 = vsyncpa [#allocation3], 1
    %142 = vsyncpa [#allocation4], 1

</llo_original>
